<compile_context>
chip_gen: v7x
topology: tpu7x:2x2x1
jax: 0.10.0
libtpu: 0.0.40
codegen_flags: <defaults>
</compile_context>

<pallas_src>
import jax
import jax.numpy as jnp
from jax.experimental import pallas as pl
from jax.experimental.pallas import tpu as pltpu


# --------------------------------------------------------------------------
# small helpers
# --------------------------------------------------------------------------
def _round_up(n, m):
    return ((n + m - 1) // m) * m


def _lane_round(n):
    # v6e/v7x MXU tiles are 256 wide: pad to 256 once the feature dim is
    # >= 256.  (v5e's 4x128x128 MXU is already saturated at 128; the extra
    # padding there costs only a little memory on padded zeros.)
    return _round_up(n, 256) if n >= 256 else _round_up(n, 128)


def _pad2d(a, rows, cols):
    pr, pc = rows - a.shape[0], cols - a.shape[1]
    if pr == 0 and pc == 0:
        return a
    return jnp.pad(a, ((0, pr), (0, pc)))


def _vmem_budget_bytes():
    """~75% of physical VMEM: ~96 MiB on v5e/v6e (128 MiB), ~48 MiB on v7x (64 MiB)."""
    cap = 64 << 20  # conservative fallback = v7x physical VMEM
    try:
        cap = int(pltpu.get_tpu_info().vmem_capacity_bytes)
    except Exception:
        pass
    return int(cap * 3 // 4)


# --------------------------------------------------------------------------
# kernel: one batch tile of fused fc1 -> ReLU -> fc2 -> ReLU -> fc3
# --------------------------------------------------------------------------
def mlp_kernel(x_ref, w1_ref, b1_ref, w2_ref, b2_ref, w3_ref, b3_ref, o_ref):
    """
    x_ref : (TILE_B, Ip)   activations (f32 or bf16), streamed per grid step
    w*_ref: (in_p, out_p)  weights pre-transposed to (in, out), VMEM-resident
    b*_ref: (1, out_p)     biases, f32
    o_ref : (TILE_B, Op)
    Matmuls accumulate in f32 on the MXU; bias add + ReLU stay f32 on the VPU.
    """
    h1 = jnp.dot(x_ref[...], w1_ref[...], preferred_element_type=jnp.float32)
    h1 = jnp.maximum(h1 + b1_ref[...], 0.0)

    h2 = jnp.dot(h1.astype(w2_ref.dtype), w2_ref[...],
                 preferred_element_type=jnp.float32)
    h2 = jnp.maximum(h2 + b2_ref[...], 0.0)

    out = jnp.dot(h2.astype(w3_ref.dtype), w3_ref[...],
                  preferred_element_type=jnp.float32)
    o_ref[...] = (out + b3_ref[...]).astype(o_ref.dtype)


# --------------------------------------------------------------------------
# one-time weight preparation (hoisted out of the forward path)
# --------------------------------------------------------------------------
def prepare_params(params, *, compute_dtype=jnp.bfloat16):
    """Transpose torch-layout weights (out,in)->(in,out), zero-pad feature
    dims to lane-dense multiples, cast weights to the MXU compute dtype
    (biases stay f32).  Call once and reuse across forward calls."""
    w1, b1 = params["w1"], params["b1"]
    w2, b2 = params["w2"], params["b2"]
    w3, b3 = params["w3"], params["b3"]
    in_size, hidden_size, out_size = w1.shape[1], w1.shape[0], w3.shape[0]
    Ip, Hp, Op = _lane_round(in_size), _lane_round(hidden_size), _lane_round(out_size)
    cdt = jnp.dtype(compute_dtype)
    return {
        "w1t": _pad2d(w1.T, Ip, Hp).astype(cdt),
        "w2t": _pad2d(w2.T, Hp, Hp).astype(cdt),
        "w3t": _pad2d(w3.T, Hp, Op).astype(cdt),
        "b1r": _pad2d(b1[None, :].astype(jnp.float32), 1, Hp),
        "b2r": _pad2d(b2[None, :].astype(jnp.float32), 1, Hp),
        "b3r": _pad2d(b3[None, :].astype(jnp.float32), 1, Op),
        "meta": {
            "in_size": in_size, "hidden_size": hidden_size, "out_size": out_size,
            "Ip": Ip, "Hp": Hp, "Op": Op, "compute_dtype": cdt,
        },
    }


# --------------------------------------------------------------------------
# pallas_call wrapper
# --------------------------------------------------------------------------
_SINGLE_BUFFER_OK = None  # lazily probed: does this JAX accept pl.Buffered(1)?


def _resident_spec(shape, single_buffer):
    if single_buffer:
        # Constant index_map already stops re-DMA; Buffered(1) also stops the
        # pipeliner from allocating a second (useless) VMEM buffer.
        return pl.BlockSpec(shape, lambda i: (0, 0), pipeline_mode=pl.Buffered(1))
    return pl.BlockSpec(shape, lambda i: (0, 0))


def _run_pallas(xp, prep, *, TILE_B, n_tiles, out_dtype, vmem_bytes, cost,
                single_buffer):
    m = prep["meta"]
    Ip, Hp, Op = m["Ip"], m["Hp"], m["Op"]
    return pl.pallas_call(
        mlp_kernel,
        out_shape=jax.ShapeDtypeStruct((n_tiles * TILE_B, Op), out_dtype),
        grid=(n_tiles,),
        in_specs=[
            pl.BlockSpec((TILE_B, Ip), lambda i: (i, 0)),   # x: streamed per tile
            _resident_spec((Ip, Hp), single_buffer),        # fc1 weight (resident)
            _resident_spec((1, Hp), single_buffer),         # fc1 bias
            _resident_spec((Hp, Hp), single_buffer),        # fc2 weight
            _resident_spec((1, Hp), single_buffer),         # fc2 bias
            _resident_spec((Hp, Op), single_buffer),        # fc3 weight
            _resident_spec((1, Op), single_buffer),         # fc3 bias
        ],
        out_specs=pl.BlockSpec((TILE_B, Op), lambda i: (i, 0)),
        compiler_params=pltpu.CompilerParams(
            dimension_semantics=("parallel",),
            vmem_limit_bytes=vmem_bytes,
        ),
        cost_estimate=cost,
    )(xp, prep["w1t"], prep["b1r"], prep["w2t"], prep["b2r"],
      prep["w3t"], prep["b3r"])


def neural_net_forward(x, prepared, *, tile_b=None, slice_output=True):
    """Forward pass of NeuralNet as one fused Pallas kernel.

    x        : (B, input_size) activations.
    prepared : output of prepare_params() (padded / transposed / cast weights).
    tile_b   : optional batch-tile override (default 512 f32 / 1024 bf16,
               auto-shrunk to the per-generation VMEM budget).
    slice_output: if False, returns the padded (Bp, Op) slab (saves one HBM
               round-trip when downstream code tolerates padded lanes).
    Note: on the bf16 path x is cast to bf16 before the first matmul
    (accumulation is always f32).
    """
    global _SINGLE_BUFFER_OK
    m = prepared["meta"]
    Ip, Hp, Op = m["Ip"], m["Hp"], m["Op"]
    out_size = m["out_size"]
    cdt = m["compute_dtype"]
    cdt_size = cdt.itemsize
    use_bf16 = cdt == jnp.dtype(jnp.bfloat16)
    out_dtype = x.dtype
    out_itemsize = jnp.dtype(out_dtype).itemsize

    B = x.shape[0]
    sub = 16 if use_bf16 else 8  # sublane multiple (bf16 packs 2 rows / sublane)

    # ---- batch tile selection ---------------------------------------------
    desired = tile_b if tile_b is not None else (1024 if use_bf16 else 512)
    TILE_B = _round_up(min(max(desired, sub), max(B, sub)), sub)
    if B > sub:
        # keep >= 2 grid steps so ("parallel",) can use both v7x TensorCores
        TILE_B = min(TILE_B, _round_up(pl.cdiv(B, 2), sub))

    resident_bytes = sum(int(prepared[k].size) * prepared[k].dtype.itemsize
                         for k in ("w1t", "w2t", "w3t", "b1r", "b2r", "b3r"))
    budget = _vmem_budget_bytes()
    slack = 4 << 20

    def vmem_needed(tb, weight_bufs):
        stream = 2 * tb * Ip * cdt_size + 2 * tb * Op * out_itemsize  # x / out double-buffered
        interm = 2 * tb * Hp * 4                                      # h1 / h2 f32 intermediates
        return weight_bufs * resident_bytes + stream + interm

    # shrink the batch tile until it fits the per-generation budget
    while TILE_B > sub and vmem_needed(TILE_B, 1) + slack > budget:
        TILE_B = max(sub, _round_up(TILE_B // 2, sub))

    Bp = _round_up(B, TILE_B)
    n_tiles = Bp // TILE_B

    # ---- per-call layout glue: only x (weights are prepared once) ----------
    xp = _pad2d(x, Bp, Ip).astype(cdt)

    flops = 2 * B * (m["in_size"] * m["hidden_size"]
                     + m["hidden_size"] * m["hidden_size"]
                     + m["hidden_size"] * out_size)
    bytes_accessed = (int(xp.size) * cdt_size + resident_bytes
                      + Bp * Op * out_itemsize)
    cost = pl.CostEstimate(flops=int(flops), transcendentals=0,
                           bytes_accessed=int(bytes_accessed))

    def call(single_buffer):
        vmem_bytes = int(min(budget,
                             max(vmem_needed(TILE_B, 1 if single_buffer else 2) + slack,
                                 16 << 20)))
        return _run_pallas(xp, prepared, TILE_B=TILE_B, n_tiles=n_tiles,
                           out_dtype=out_dtype, vmem_bytes=vmem_bytes, cost=cost,
                           single_buffer=single_buffer)

    want_single = hasattr(pl, "Buffered") and _SINGLE_BUFFER_OK is not False
    if want_single and _SINGLE_BUFFER_OK is None:
        # Probe once (run the first call eagerly, before any jax.jit, so a
        # rejected pipeline_mode is caught here and we fall back cleanly).
        try:
            out_padded = call(True)
            _SINGLE_BUFFER_OK = True
        except Exception:
            _SINGLE_BUFFER_OK = False
            out_padded = call(False)
    else:
        out_padded = call(bool(want_single))

    if slice_output:
        return out_padded[:B, :out_size]
    return out_padded


# --------------------------------------------------------------------------
# reference + init (torch nn.Linear layout: weight (out, in), bias (out,))
# --------------------------------------------------------------------------
def init_params(key, input_size, hidden_size, output_size):
    ks = jax.random.split(key, 6)

    def lin(kw, kb, fan_in, fan_out):
        bound = 1.0 / jnp.sqrt(fan_in)
        w = jax.random.uniform(kw, (fan_out, fan_in), jnp.float32, -bound, bound)
        b = jax.random.uniform(kb, (fan_out,), jnp.float32, -bound, bound)
        return w, b

    w1, b1 = lin(ks[0], ks[1], input_size, hidden_size)
    w2, b2 = lin(ks[2], ks[3], hidden_size, hidden_size)
    w3, b3 = lin(ks[4], ks[5], hidden_size, output_size)
    return {"w1": w1, "b1": b1, "w2": w2, "b2": b2, "w3": w3, "b3": b3}


def reference_forward(x, p):
    h = jnp.maximum(x @ p["w1"].T + p["b1"], 0.0)
    h = jnp.maximum(h @ p["w2"].T + p["b2"], 0.0)
    return h @ p["w3"].T + p["b3"]


if __name__ == "__main__":
    input_size, hidden_size, output_size = 32, 32, 16
    batch = 8

    key = jax.random.PRNGKey(0)
    kx, kp, kx2 = jax.random.split(key, 3)
    x = jax.random.normal(kx, (batch, input_size), jnp.float32)
    params = init_params(kp, input_size, hidden_size, output_size)

    # f32 MXU path (exact vs reference); weights prepared once, reused.
    prep_f32 = prepare_params(params, compute_dtype=jnp.float32)
    out = jax.block_until_ready(neural_net_forward(x, prep_f32))
    ref = reference_forward(x, params)
    assert out.shape == (batch, output_size)
    assert jnp.allclose(out, ref, atol=1e-5, rtol=1e-5), "f32 mismatch vs reference"

    # Larger batch: multi-tile pipelined grid (>= 2 tiles -> v7x megacore).
    xb = jax.random.normal(kx2, (200, input_size), jnp.float32)
    refb = reference_forward(xb, params)
    outb = jax.block_until_ready(neural_net_forward(xb, prep_f32))
    assert outb.shape == (200, output_size)
    assert jnp.allclose(outb, refb, atol=1e-5, rtol=1e-5), "tiled f32 mismatch"

    # Default bf16 MXU-input path (f32 accumulation), jitted steady-state call
    # (the Buffered(1) probe was already resolved by the eager calls above).
    prep_bf16 = prepare_params(params)  # compute_dtype=jnp.bfloat16 by default
    fwd_bf16 = jax.jit(lambda xx: neural_net_forward(xx, prep_bf16))
    outbf = jax.block_until_ready(fwd_bf16(xb))
    assert outbf.shape == (200, output_size)
    assert jnp.allclose(outbf, refb, atol=5e-2, rtol=5e-2), "bf16 mismatch"

    print("KERNEL_OK")
</pallas_src>

<mosaic_0001>
module attributes {stable_mosaic.version = 11 : i64} {
  func.func @mlp_kernel(%arg0: i32, %arg1: memref<8x128xf32, #tpu.memory_space<vmem>>, %arg2: memref<128x128xf32, #tpu.memory_space<vmem>>, %arg3: memref<1x128xf32, #tpu.memory_space<vmem>>, %arg4: memref<128x128xf32, #tpu.memory_space<vmem>>, %arg5: memref<1x128xf32, #tpu.memory_space<vmem>>, %arg6: memref<128x128xf32, #tpu.memory_space<vmem>>, %arg7: memref<1x128xf32, #tpu.memory_space<vmem>>, %arg8: memref<8x128xf32, #tpu.memory_space<vmem>>) attributes {dimension_semantics = [#tpu.dimension_semantics<parallel>], iteration_bounds = array<i64: 1>, scalar_prefetch = 0 : i64, scratch_operands = 0 : i64, tpu.core_type = #tpu.core_type<tc>, window_params = [{transform_indices = @transform_0, window_bounds = array<i64: 8, 128>}, {pipeline_mode = #tpu.pipeline_mode<synchronous>, transform_indices = @transform_1, window_bounds = array<i64: 128, 128>}, {pipeline_mode = #tpu.pipeline_mode<synchronous>, transform_indices = @transform_2, window_bounds = array<i64: 1, 128>}, {pipeline_mode = #tpu.pipeline_mode<synchronous>, transform_indices = @transform_3, window_bounds = array<i64: 128, 128>}, {pipeline_mode = #tpu.pipeline_mode<synchronous>, transform_indices = @transform_4, window_bounds = array<i64: 1, 128>}, {pipeline_mode = #tpu.pipeline_mode<synchronous>, transform_indices = @transform_5, window_bounds = array<i64: 128, 128>}, {pipeline_mode = #tpu.pipeline_mode<synchronous>, transform_indices = @transform_6, window_bounds = array<i64: 1, 128>}, {transform_indices = @transform_7, window_bounds = array<i64: 8, 128>}]} {
    %c0 = arith.constant 0 : index
    %c0_0 = arith.constant 0 : index
    %0 = vector.load %arg1[%c0, %c0_0] : memref<8x128xf32, #tpu.memory_space<vmem>>, vector<8x128xf32>
    %c0_1 = arith.constant 0 : index
    %c0_2 = arith.constant 0 : index
    %1 = vector.load %arg2[%c0_1, %c0_2] : memref<128x128xf32, #tpu.memory_space<vmem>>, vector<128x128xf32>
    %cst = arith.constant dense<0.000000e+00> : vector<8x128xf32>
    %2 = tpu.matmul %0, %1, %cst {dimension_numbers = #tpu.dot_dimension_numbers<[1], [0], [0], [1], [0, 0, 1, 1], [], []>} : vector<8x128xf32>, vector<128x128xf32>, vector<8x128xf32> -> vector<8x128xf32>
    %c0_3 = arith.constant 0 : index
    %c0_4 = arith.constant 0 : index
    %3 = vector.load %arg3[%c0_3, %c0_4] : memref<1x128xf32, #tpu.memory_space<vmem>>, vector<1x128xf32>
    %4 = vector.broadcast %3 : vector<1x128xf32> to vector<8x128xf32>
    %5 = arith.addf %2, %4 : vector<8x128xf32>
    %cst_5 = arith.constant 0.000000e+00 : f32
    %6 = vector.broadcast %cst_5 : f32 to vector<8x128xf32>
    %7 = arith.maximumf %5, %6 : vector<8x128xf32>
    %c0_6 = arith.constant 0 : index
    %c0_7 = arith.constant 0 : index
    %8 = vector.load %arg4[%c0_6, %c0_7] : memref<128x128xf32, #tpu.memory_space<vmem>>, vector<128x128xf32>
    %cst_8 = arith.constant dense<0.000000e+00> : vector<8x128xf32>
    %9 = tpu.matmul %7, %8, %cst_8 {dimension_numbers = #tpu.dot_dimension_numbers<[1], [0], [0], [1], [0, 0, 1, 1], [], []>} : vector<8x128xf32>, vector<128x128xf32>, vector<8x128xf32> -> vector<8x128xf32>
    %c0_9 = arith.constant 0 : index
    %c0_10 = arith.constant 0 : index
    %10 = vector.load %arg5[%c0_9, %c0_10] : memref<1x128xf32, #tpu.memory_space<vmem>>, vector<1x128xf32>
    %11 = vector.broadcast %10 : vector<1x128xf32> to vector<8x128xf32>
    %12 = arith.addf %9, %11 : vector<8x128xf32>
    %cst_11 = arith.constant 0.000000e+00 : f32
    %13 = vector.broadcast %cst_11 : f32 to vector<8x128xf32>
    %14 = arith.maximumf %12, %13 : vector<8x128xf32>
    %c0_12 = arith.constant 0 : index
    %c0_13 = arith.constant 0 : index
    %15 = vector.load %arg6[%c0_12, %c0_13] : memref<128x128xf32, #tpu.memory_space<vmem>>, vector<128x128xf32>
    %cst_14 = arith.constant dense<0.000000e+00> : vector<8x128xf32>
    %16 = tpu.matmul %14, %15, %cst_14 {dimension_numbers = #tpu.dot_dimension_numbers<[1], [0], [0], [1], [0, 0, 1, 1], [], []>} : vector<8x128xf32>, vector<128x128xf32>, vector<8x128xf32> -> vector<8x128xf32>
    %c0_15 = arith.constant 0 : index
    %c0_16 = arith.constant 0 : index
    %17 = vector.load %arg7[%c0_15, %c0_16] : memref<1x128xf32, #tpu.memory_space<vmem>>, vector<1x128xf32>
    %18 = vector.broadcast %17 : vector<1x128xf32> to vector<8x128xf32>
    %19 = arith.addf %16, %18 : vector<8x128xf32>
    %c0_17 = arith.constant 0 : index
    %c0_18 = arith.constant 0 : index
    %20 = vector.load %arg8[%c0_17, %c0_18] : memref<8x128xf32, #tpu.memory_space<vmem>>, vector<8x128xf32>
    tpu.vector_store %arg8[%c0_17, %c0_18], %19 {strides = array<i32>} : memref<8x128xf32, #tpu.memory_space<vmem>>, vector<8x128xf32>,
    return
  }
  func.func @transform_0(%arg0: i32) -> (i32, i32) {
    %c0_i32 = arith.constant 0 : i32
    %c0_i32_0 = arith.constant 0 : i32
    return %arg0, %c0_i32 : i32, i32
  }
  func.func @transform_1(%arg0: i32) -> (i32, i32) {
    %c0_i32 = arith.constant 0 : i32
    %c0_i32_0 = arith.constant 0 : i32
    %c0_i32_1 = arith.constant 0 : i32
    return %c0_i32, %c0_i32_0 : i32, i32
  }
  func.func @transform_2(%arg0: i32) -> (i32, i32) {
    %c0_i32 = arith.constant 0 : i32
    %c0_i32_0 = arith.constant 0 : i32
    %c0_i32_1 = arith.constant 0 : i32
    return %c0_i32, %c0_i32_0 : i32, i32
  }
  func.func @transform_3(%arg0: i32) -> (i32, i32) {
    %c0_i32 = arith.constant 0 : i32
    %c0_i32_0 = arith.constant 0 : i32
    %c0_i32_1 = arith.constant 0 : i32
    return %c0_i32, %c0_i32_0 : i32, i32
  }
  func.func @transform_4(%arg0: i32) -> (i32, i32) {
    %c0_i32 = arith.constant 0 : i32
    %c0_i32_0 = arith.constant 0 : i32
    %c0_i32_1 = arith.constant 0 : i32
    return %c0_i32, %c0_i32_0 : i32, i32
  }
  func.func @transform_5(%arg0: i32) -> (i32, i32) {
    %c0_i32 = arith.constant 0 : i32
    %c0_i32_0 = arith.constant 0 : i32
    %c0_i32_1 = arith.constant 0 : i32
    return %c0_i32, %c0_i32_0 : i32, i32
  }
  func.func @transform_6(%arg0: i32) -> (i32, i32) {
    %c0_i32 = arith.constant 0 : i32
    %c0_i32_0 = arith.constant 0 : i32
    %c0_i32_1 = arith.constant 0 : i32
    return %c0_i32, %c0_i32_0 : i32, i32
  }
  func.func @transform_7(%arg0: i32) -> (i32, i32) {
    %c0_i32 = arith.constant 0 : i32
    %c0_i32_0 = arith.constant 0 : i32
    return %arg0, %c0_i32 : i32, i32
  }
}

module attributes {stable_mosaic.version = 11 : i64} {
  func.func @mlp_kernel(%arg0: i32, %arg1: memref<8x128xf32, #tpu.memory_space<vmem>>, %arg2: memref<128x128xf32, #tpu.memory_space<vmem>>, %arg3: memref<1x128xf32, #tpu.memory_space<vmem>>, %arg4: memref<128x128xf32, #tpu.memory_space<vmem>>, %arg5: memref<1x128xf32, #tpu.memory_space<vmem>>, %arg6: memref<128x128xf32, #tpu.memory_space<vmem>>, %arg7: memref<1x128xf32, #tpu.memory_space<vmem>>, %arg8: memref<8x128xf32, #tpu.memory_space<vmem>>) attributes {dimension_semantics = [#tpu.dimension_semantics<parallel>], iteration_bounds = array<i64: 1>, scalar_prefetch = 0 : i64, scratch_operands = 0 : i64, tpu.core_type = #tpu.core_type<tc>, window_params = [{transform_indices = @transform_0, window_bounds = array<i64: 8, 128>}, {pipeline_mode = #tpu.pipeline_mode<synchronous>, transform_indices = @transform_1, window_bounds = array<i64: 128, 128>}, {pipeline_mode = #tpu.pipeline_mode<synchronous>, transform_indices = @transform_2, window_bounds = array<i64: 1, 128>}, {pipeline_mode = #tpu.pipeline_mode<synchronous>, transform_indices = @transform_3, window_bounds = array<i64: 128, 128>}, {pipeline_mode = #tpu.pipeline_mode<synchronous>, transform_indices = @transform_4, window_bounds = array<i64: 1, 128>}, {pipeline_mode = #tpu.pipeline_mode<synchronous>, transform_indices = @transform_5, window_bounds = array<i64: 128, 128>}, {pipeline_mode = #tpu.pipeline_mode<synchronous>, transform_indices = @transform_6, window_bounds = array<i64: 1, 128>}, {transform_indices = @transform_7, window_bounds = array<i64: 8, 128>}]} {
    %c0 = arith.constant 0 : index
    %c0_0 = arith.constant 0 : index
    %0 = vector.load %arg1[%c0, %c0_0] : memref<8x128xf32, #tpu.memory_space<vmem>>, vector<8x128xf32>
    %c0_1 = arith.constant 0 : index
    %c0_2 = arith.constant 0 : index
    %1 = vector.load %arg2[%c0_1, %c0_2] : memref<128x128xf32, #tpu.memory_space<vmem>>, vector<128x128xf32>
    %cst = arith.constant dense<0.000000e+00> : vector<8x128xf32>
    %2 = tpu.matmul %0, %1, %cst {dimension_numbers = #tpu.dot_dimension_numbers<[1], [0], [0], [1], [0, 0, 1, 1], [], []>} : vector<8x128xf32>, vector<128x128xf32>, vector<8x128xf32> -> vector<8x128xf32>
    %c0_3 = arith.constant 0 : index
    %c0_4 = arith.constant 0 : index
    %3 = vector.load %arg3[%c0_3, %c0_4] : memref<1x128xf32, #tpu.memory_space<vmem>>, vector<1x128xf32>
    %4 = vector.broadcast %3 : vector<1x128xf32> to vector<8x128xf32>
    %5 = arith.addf %2, %4 : vector<8x128xf32>
    %cst_5 = arith.constant 0.000000e+00 : f32
    %6 = vector.broadcast %cst_5 : f32 to vector<8x128xf32>
    %7 = arith.maximumf %5, %6 : vector<8x128xf32>
    %c0_6 = arith.constant 0 : index
    %c0_7 = arith.constant 0 : index
    %8 = vector.load %arg4[%c0_6, %c0_7] : memref<128x128xf32, #tpu.memory_space<vmem>>, vector<128x128xf32>
    %cst_8 = arith.constant dense<0.000000e+00> : vector<8x128xf32>
    %9 = tpu.matmul %7, %8, %cst_8 {dimension_numbers = #tpu.dot_dimension_numbers<[1], [0], [0], [1], [0, 0, 1, 1], [], []>} : vector<8x128xf32>, vector<128x128xf32>, vector<8x128xf32> -> vector<8x128xf32>
    %c0_9 = arith.constant 0 : index
    %c0_10 = arith.constant 0 : index
    %10 = vector.load %arg5[%c0_9, %c0_10] : memref<1x128xf32, #tpu.memory_space<vmem>>, vector<1x128xf32>
    %11 = vector.broadcast %10 : vector<1x128xf32> to vector<8x128xf32>
    %12 = arith.addf %9, %11 : vector<8x128xf32>
    %cst_11 = arith.constant 0.000000e+00 : f32
    %13 = vector.broadcast %cst_11 : f32 to vector<8x128xf32>
    %14 = arith.maximumf %12, %13 : vector<8x128xf32>
    %c0_12 = arith.constant 0 : index
    %c0_13 = arith.constant 0 : index
    %15 = vector.load %arg6[%c0_12, %c0_13] : memref<128x128xf32, #tpu.memory_space<vmem>>, vector<128x128xf32>
    %cst_14 = arith.constant dense<0.000000e+00> : vector<8x128xf32>
    %16 = tpu.matmul %14, %15, %cst_14 {dimension_numbers = #tpu.dot_dimension_numbers<[1], [0], [0], [1], [0, 0, 1, 1], [], []>} : vector<8x128xf32>, vector<128x128xf32>, vector<8x128xf32> -> vector<8x128xf32>
    %c0_15 = arith.constant 0 : index
    %c0_16 = arith.constant 0 : index
    %17 = vector.load %arg7[%c0_15, %c0_16] : memref<1x128xf32, #tpu.memory_space<vmem>>, vector<1x128xf32>
    %18 = vector.broadcast %17 : vector<1x128xf32> to vector<8x128xf32>
    %19 = arith.addf %16, %18 : vector<8x128xf32>
    %c0_17 = arith.constant 0 : index
    %c0_18 = arith.constant 0 : index
    %20 = vector.load %arg8[%c0_17, %c0_18] : memref<8x128xf32, #tpu.memory_space<vmem>>, vector<8x128xf32>
    tpu.vector_store %arg8[%c0_17, %c0_18], %19 {strides = array<i32>} : memref<8x128xf32, #tpu.memory_space<vmem>>, vector<8x128xf32>,
    return
  }
  func.func @transform_0(%arg0: i32) -> (i32, i32) {
    %c0_i32 = arith.constant 0 : i32
    %c0_i32_0 = arith.constant 0 : i32
    return %arg0, %c0_i32 : i32, i32
  }
  func.func @transform_1(%arg0: i32) -> (i32, i32) {
    %c0_i32 = arith.constant 0 : i32
    %c0_i32_0 = arith.constant 0 : i32
    %c0_i32_1 = arith.constant 0 : i32
    return %c0_i32, %c0_i32_0 : i32, i32
  }
  func.func @transform_2(%arg0: i32) -> (i32, i32) {
    %c0_i32 = arith.constant 0 : i32
    %c0_i32_0 = arith.constant 0 : i32
    %c0_i32_1 = arith.constant 0 : i32
    return %c0_i32, %c0_i32_0 : i32, i32
  }
  func.func @transform_3(%arg0: i32) -> (i32, i32) {
    %c0_i32 = arith.constant 0 : i32
    %c0_i32_0 = arith.constant 0 : i32
    %c0_i32_1 = arith.constant 0 : i32
    return %c0_i32, %c0_i32_0 : i32, i32
  }
  func.func @transform_4(%arg0: i32) -> (i32, i32) {
    %c0_i32 = arith.constant 0 : i32
    %c0_i32_0 = arith.constant 0 : i32
    %c0_i32_1 = arith.constant 0 : i32
    return %c0_i32, %c0_i32_0 : i32, i32
  }
  func.func @transform_5(%arg0: i32) -> (i32, i32) {
    %c0_i32 = arith.constant 0 : i32
    %c0_i32_0 = arith.constant 0 : i32
    %c0_i32_1 = arith.constant 0 : i32
    return %c0_i32, %c0_i32_0 : i32, i32
  }
  func.func @transform_6(%arg0: i32) -> (i32, i32) {
    %c0_i32 = arith.constant 0 : i32
    %c0_i32_0 = arith.constant 0 : i32
    %c0_i32_1 = arith.constant 0 : i32
    return %c0_i32, %c0_i32_0 : i32, i32
  }
  func.func @transform_7(%arg0: i32) -> (i32, i32) {
    %c0_i32 = arith.constant 0 : i32
    %c0_i32_0 = arith.constant 0 : i32
    return %arg0, %c0_i32 : i32, i32
  }
}

</mosaic_0001>

<llo_original>
// kernel: tpu_custom_call.1
$region0: #{tpu_custom_call.1}
  #allocation0 [shape = 'u32[]', space=smem, size = 0x4, offset = 0x4, fixed_abs, tag = 'smem constant byte address 0x4 - core index']
  #allocation1 [shape = 'u32[144,128]{1,0:T(1,128)}', space=vmem, size = 0x12000, scoped, tag = 'internal scratch']
  %s0 = inlined_call_operand.hbm [shape: f32[8,128], index: 0, kind: input, shape index: {}]
  %s1 = inlined_call_operand.hbm [shape: f32[128,128], index: 1, kind: input, shape index: {}]
  %s2 = inlined_call_operand.vmem [shape: f32[1,128], index: 2, kind: input, shape index: {}]
  %s3 = inlined_call_operand.hbm [shape: f32[128,128], index: 3, kind: input, shape index: {}]
  %s4 = inlined_call_operand.vmem [shape: f32[1,128], index: 4, kind: input, shape index: {}]
  %s5 = inlined_call_operand.hbm [shape: f32[128,128], index: 5, kind: input, shape index: {}]
  %s6 = inlined_call_operand.vmem [shape: f32[1,128], index: 6, kind: input, shape index: {}]
  %s7 = inlined_call_operand.hbm [shape: f32[8,128], index: 7, kind: output, shape index: {}]
  %s8 = sld [smem:[#allocation0]]
  $region54: #{tpu_custom_call.1} parent=0
    _
  %s10 = ssub.s32 1, %s8
  %s11 = scalar_select 0, %s10, %s8
  $region1: #{tpu_custom_call.1} parent=0
    #allocation2 [shape = 'u8[4096]{0}', space=vmem, size = 0x1000, scoped, tag = 'input window, operand 0, single buffered']
    #allocation3 [shape = 's32[1]{0}', space=sflag, size = 0x4, scoped, tag = 'scoped memory for tpu_custom_call.1']
    #allocation4 [shape = 's32[1]{0}', space=sflag, size = 0x4, scoped, tag = 'scoped memory for tpu_custom_call.1']
    #allocation5 [shape = 'u8[65536]{0}', space=vmem, size = 0x10000, scoped, tag = 'input window, operand 1, single buffered']
    #allocation6 [shape = 's32[1]{0}', space=sflag, size = 0x4, scoped, tag = 'scoped memory for tpu_custom_call.1']
    #allocation7 [shape = 'u8[65536]{0}', space=vmem, size = 0x10000, scoped, tag = 'input window, operand 3, single buffered']
    #allocation8 [shape = 'u8[65536]{0}', space=vmem, size = 0x10000, scoped, tag = 'input window, operand 5, single buffered']
    #allocation9 [shape = 's32[1]{0}', space=sflag, size = 0x4, scoped, tag = 'scoped memory for tpu_custom_call.1']
    #allocation10 [shape = 'u8[4096]{0}', space=vmem, size = 0x1000, scoped, tag = 'output window, operand 0, single buffered']
    %12 = vsyncpa [#allocation3], 0
    %13 = vsyncpa [#allocation6], 0
    %14 = vsyncpa [#allocation9], 0
    %15 = vsyncpa [#allocation4], 0
    // Predicated region
    $region2: #{tpu_custom_call.1} parent=1 // pred_check
      _
    $region3: #{tpu_custom_call.1} parent=1 // pred_check_branch
      %17 = sbr.rel (0) target = $region5
    $region4: #{tpu_custom_call.1} parent=1 // pred_region
      %s19 = ssub.s32 128, 128
      %20 = vsyncadd [#allocation3], %s19
      %s22 = sshll.u32 [#allocation2], 4
      %s23 = int_to_ptr.vmem [resolvable:$true] %s22
      %25 = dma.hbm_to_vmem [thread:$0]  %s0, 128, %s23, [#allocation3]
    $region5: #{tpu_custom_call.1} parent=1 // pred_fallthru
      _
    // Predicated region
    $region6: #{tpu_custom_call.1} parent=1 // pred_check
      _
    $region7: #{tpu_custom_call.1} parent=1 // pred_check_branch
      %27 = sbr.rel (0) target = $region9
    $region8: #{tpu_custom_call.1} parent=1 // pred_region
      %s29 = ssub.s32 2048, 2048
      %30 = vsyncadd [#allocation6], %s29
      %s31 = sshll.u32 [#allocation5], 4
      %s32 = int_to_ptr.vmem [resolvable:$true] %s31
      %37 = dma.hbm_to_vmem [thread:$0]  %s1, 2048, %s32, [#allocation6], 128, 128, 8
    $region9: #{tpu_custom_call.1} parent=1 // pred_fallthru
      _
    // Predicated region
    $region10: #{tpu_custom_call.1} parent=1 // pred_check
      _
    $region11: #{tpu_custom_call.1} parent=1 // pred_check_branch
      %39 = sbr.rel (0) target = $region13
    $region12: #{tpu_custom_call.1} parent=1 // pred_region
      _
    $region13: #{tpu_custom_call.1} parent=1 // pred_fallthru
      _
    // Predicated region
    $region14: #{tpu_custom_call.1} parent=1 // pred_check
      _
    $region15: #{tpu_custom_call.1} parent=1 // pred_check_branch
      %41 = sbr.rel (0) target = $region17
    $region16: #{tpu_custom_call.1} parent=1 // pred_region
      %s43 = ssub.s32 2048, 2048
      %44 = vsyncadd [#allocation6], %s43
      %s45 = sshll.u32 [#allocation7], 4
      %s46 = int_to_ptr.vmem [resolvable:$true] %s45
      %51 = dma.hbm_to_vmem [thread:$0]  %s3, 2048, %s46, [#allocation6], 128, 128, 8
    $region17: #{tpu_custom_call.1} parent=1 // pred_fallthru
      _
    // Predicated region
    $region18: #{tpu_custom_call.1} parent=1 // pred_check
      _
    $region19: #{tpu_custom_call.1} parent=1 // pred_check_branch
      %53 = sbr.rel (0) target = $region21
    $region20: #{tpu_custom_call.1} parent=1 // pred_region
      _
    $region21: #{tpu_custom_call.1} parent=1 // pred_fallthru
      _
    // Predicated region
    $region22: #{tpu_custom_call.1} parent=1 // pred_check
      _
    $region23: #{tpu_custom_call.1} parent=1 // pred_check_branch
      %55 = sbr.rel (0) target = $region25
    $region24: #{tpu_custom_call.1} parent=1 // pred_region
      %s57 = ssub.s32 2048, 2048
      %58 = vsyncadd [#allocation9], %s57
      %s59 = sshll.u32 [#allocation8], 4
      %s60 = int_to_ptr.vmem [resolvable:$true] %s59
      %65 = dma.hbm_to_vmem [thread:$0]  %s5, 2048, %s60, [#allocation9], 128, 128, 8
    $region25: #{tpu_custom_call.1} parent=1 // pred_fallthru
      _
    // Predicated region
    $region26: #{tpu_custom_call.1} parent=1 // pred_check
      _
    $region27: #{tpu_custom_call.1} parent=1 // pred_check_branch
      %67 = sbr.rel (0) target = $region29
    $region28: #{tpu_custom_call.1} parent=1 // pred_region
      _
    $region29: #{tpu_custom_call.1} parent=1 // pred_fallthru
      _
    // Predicated region
    $region30: #{tpu_custom_call.1} parent=1 // pred_check
      _
    $region31: #{tpu_custom_call.1} parent=1 // pred_check_branch
      %69 = sbr.rel (0) target = $region33
    $region32: #{tpu_custom_call.1} parent=1 // pred_region
      %70 = dma.done [#allocation3], 128
    $region33: #{tpu_custom_call.1} parent=1 // pred_fallthru
      _
    // Predicated region
    $region34: #{tpu_custom_call.1} parent=1 // pred_check
      _
    $region35: #{tpu_custom_call.1} parent=1 // pred_check_branch
      %72 = sbr.rel (0) target = $region37
    $region36: #{tpu_custom_call.1} parent=1 // pred_region
      %73 = dma.done [#allocation6], 2048
    $region37: #{tpu_custom_call.1} parent=1 // pred_fallthru
      _
    // Predicated region
    $region38: #{tpu_custom_call.1} parent=1 // pred_check
      _
    $region39: #{tpu_custom_call.1} parent=1 // pred_check_branch
      %75 = sbr.rel (0) target = $region41
    $region40: #{tpu_custom_call.1} parent=1 // pred_region
      %76 = dma.done [#allocation6], 2048
    $region41: #{tpu_custom_call.1} parent=1 // pred_fallthru
      _
    // Predicated region
    $region42: #{tpu_custom_call.1} parent=1 // pred_check
      _
    $region43: #{tpu_custom_call.1} parent=1 // pred_check_branch
      %78 = sbr.rel (0) target = $region45
    $region44: #{tpu_custom_call.1} parent=1 // pred_region
      %79 = dma.done [#allocation9], 2048
    $region45: #{tpu_custom_call.1} parent=1 // pred_fallthru
      _
    %v80 = vld [vmem:[#allocation2] sm:$0xff]
    %v81 = vld [vmem:[#allocation5] sm:$0xff]
    %v82 = vld [vmem:[#allocation5 + $0x8] sm:$0xff]
    %v83 = vld [vmem:[#allocation5 + $0x10] sm:$0xff]
    %v84 = vld [vmem:[#allocation5 + $0x18] sm:$0xff]
    %v85 = vld [vmem:[#allocation5 + $0x20] sm:$0xff]
    %v86 = vld [vmem:[#allocation5 + $0x28] sm:$0xff]
    %v87 = vld [vmem:[#allocation5 + $0x30] sm:$0xff]
    %v88 = vld [vmem:[#allocation5 + $0x38] sm:$0xff]
    %v89 = vld [vmem:[#allocation5 + $0x40] sm:$0xff]
    %v90 = vld [vmem:[#allocation5 + $0x48] sm:$0xff]
    %v91 = vld [vmem:[#allocation5 + $0x50] sm:$0xff]
    %v92 = vld [vmem:[#allocation5 + $0x58] sm:$0xff]
    %v93 = vld [vmem:[#allocation5 + $0x60] sm:$0xff]
    %v94 = vld [vmem:[#allocation5 + $0x68] sm:$0xff]
    %v95 = vld [vmem:[#allocation5 + $0x70] sm:$0xff]
    %v96 = vld [vmem:[#allocation5 + $0x78] sm:$0xff]
    %v97 = vld [vmem:[%s2] sm:$0x1]
    %v99 = vlaneseq
    %v100 = vshrl.u32 %v99, 7
    %v101 = vsub.s32 0, %v100
    %v102 = vrot.slane %v97, %v101
    %104 = vmatprep.subr.mxu0 0.0
    %105 = vmatpush1.msra.mxu0 %v81
    %106 = vmatprep.subr.mxu0 0.0
    %107 = vmatpush1.msra.mxu0 %v82
    %108 = vmatprep.subr.mxu0 0.0
    %109 = vmatpush1.msra.mxu0 %v83
    %110 = vmatprep.subr.mxu0 0.0
    %111 = vmatpush1.msra.mxu0 %v84
    %112 = vmatprep.subr.mxu0 0.0
    %113 = vmatpush1.msra.mxu0 %v85
    %114 = vmatprep.subr.mxu0 0.0
    %115 = vmatpush1.msra.mxu0 %v86
    %116 = vmatprep.subr.mxu0 0.0
    %117 = vmatpush1.msra.mxu0 %v87
    %118 = vmatprep.subr.mxu0 0.0
    %119 = vmatpush1.msra.mxu0 %v88
    %120 = vmatprep.subr.mxu0 0.0
    %121 = vmatpush1.msra.mxu0 %v89
    %122 = vmatprep.subr.mxu0 0.0
    %123 = vmatpush1.msra.mxu0 %v90
    %124 = vmatprep.subr.mxu0 0.0
    %125 = vmatpush1.msra.mxu0 %v91
    %126 = vmatprep.subr.mxu0 0.0
    %127 = vmatpush1.msra.mxu0 %v92
    %128 = vmatprep.subr.mxu0 0.0
    %129 = vmatpush1.msra.mxu0 %v93
    %130 = vmatprep.subr.mxu0 0.0
    %131 = vmatpush1.msra.mxu0 %v94
    %132 = vmatprep.subr.mxu0 0.0
    %133 = vmatpush1.msra.mxu0 %v95
    %134 = vmatprep.subr.mxu0 0.0
    %135 = vmatpush1.msra.mxu0 %v96
    %136 = vmatprep.subr.mxu0 0.0
    %137 = vmatpush1.msra.mxu0 0.0
    %138 = vmatprep.subr.mxu0 0.0
    %139 = vmatpush1.msra.mxu0 0.0
    %140 = vmatprep.subr.mxu0 0.0
    %141 = vmatpush1.msra.mxu0 0.0
    %142 = vmatprep.subr.mxu0 0.0
    %143 = vmatpush1.msra.mxu0 0.0
    %144 = vmatprep.subr.mxu0 0.0
    %145 = vmatpush1.msra.mxu0 0.0
    %146 = vmatprep.subr.mxu0 0.0
    %147 = vmatpush1.msra.mxu0 0.0
    %148 = vmatprep.subr.mxu0 0.0
    %149 = vmatpush1.msra.mxu0 0.0
    %150 = vmatprep.subr.mxu0 0.0
    %151 = vmatpush1.msra.mxu0 0.0
    %152 = vmatprep.subr.mxu0 0.0
    %153 = vmatpush1.msra.mxu0 0.0
    %154 = vmatprep.subr.mxu0 0.0
    %155 = vmatpush1.msra.mxu0 0.0
    %156 = vmatprep.subr.mxu0 0.0
    %157 = vmatpush1.msra.mxu0 0.0
    %158 = vmatprep.subr.mxu0 0.0
    %159 = vmatpush1.msra.mxu0 0.0
    %160 = vmatprep.subr.mxu0 0.0
    %161 = vmatpush1.msra.mxu0 0.0
    %162 = vmatprep.subr.mxu0 0.0
    %163 = vmatpush1.msra.mxu0 0.0
    %164 = vmatprep.subr.mxu0 0.0
    %165 = vmatpush1.msra.mxu0 0.0
    %166 = vmatprep.subr.mxu0 0.0
    %167 = vmatpush1.msra.mxu0 0.0
    %168 = vmatprep.mubr.f32.mxu0 0.0
    %169 = vmatmul.mubr.f32.gmra.mrb[0].mxu0 %v80
    %v170 = vpop.f32.mrb[0].mxu0
    %v171 = vadd.f32 %v102, %v170
    %v172 = vpop.f32.mrb[0].mxu0
    %173 = vdwg.mxu0
    %v174 = vmax.f32 %v171, 0.0
    %v175 = vld [vmem:[#allocation7] sm:$0xff]
    %v176 = vld [vmem:[#allocation7 + $0x8] sm:$0xff]
    %v177 = vld [vmem:[#allocation7 + $0x10] sm:$0xff]
    %v178 = vld [vmem:[#allocation7 + $0x18] sm:$0xff]
    %v179 = vld [vmem:[#allocation7 + $0x20] sm:$0xff]
    %v180 = vld [vmem:[#allocation7 + $0x28] sm:$0xff]
    %v181 = vld [vmem:[#allocation7 + $0x30] sm:$0xff]
    %v182 = vld [vmem:[#allocation7 + $0x38] sm:$0xff]
    %v183 = vld [vmem:[#allocation7 + $0x40] sm:$0xff]
    %v184 = vld [vmem:[#allocation7 + $0x48] sm:$0xff]
    %v185 = vld [vmem:[#allocation7 + $0x50] sm:$0xff]
    %v186 = vld [vmem:[#allocation7 + $0x58] sm:$0xff]
    %v187 = vld [vmem:[#allocation7 + $0x60] sm:$0xff]
    %v188 = vld [vmem:[#allocation7 + $0x68] sm:$0xff]
    %v189 = vld [vmem:[#allocation7 + $0x70] sm:$0xff]
    %v190 = vld [vmem:[#allocation7 + $0x78] sm:$0xff]
    %v191 = vld [vmem:[%s4] sm:$0x1]
    %v193 = vlaneseq
    %v194 = vshrl.u32 %v193, 7
    %v195 = vsub.s32 0, %v194
    %v196 = vrot.slane %v191, %v195
    %198 = vmatprep.subr.mxu0 0.0
    %199 = vmatpush1.msra.mxu0 %v175
    %200 = vmatprep.subr.mxu0 0.0
    %201 = vmatpush1.msra.mxu0 %v176
    %202 = vmatprep.subr.mxu0 0.0
    %203 = vmatpush1.msra.mxu0 %v177
    %204 = vmatprep.subr.mxu0 0.0
    %205 = vmatpush1.msra.mxu0 %v178
    %206 = vmatprep.subr.mxu0 0.0
    %207 = vmatpush1.msra.mxu0 %v179
    %208 = vmatprep.subr.mxu0 0.0
    %209 = vmatpush1.msra.mxu0 %v180
    %210 = vmatprep.subr.mxu0 0.0
    %211 = vmatpush1.msra.mxu0 %v181
    %212 = vmatprep.subr.mxu0 0.0
    %213 = vmatpush1.msra.mxu0 %v182
    %214 = vmatprep.subr.mxu0 0.0
    %215 = vmatpush1.msra.mxu0 %v183
    %216 = vmatprep.subr.mxu0 0.0
    %217 = vmatpush1.msra.mxu0 %v184
    %218 = vmatprep.subr.mxu0 0.0
    %219 = vmatpush1.msra.mxu0 %v185
    %220 = vmatprep.subr.mxu0 0.0
    %221 = vmatpush1.msra.mxu0 %v186
    %222 = vmatprep.subr.mxu0 0.0
    %223 = vmatpush1.msra.mxu0 %v187
    %224 = vmatprep.subr.mxu0 0.0
    %225 = vmatpush1.msra.mxu0 %v188
    %226 = vmatprep.subr.mxu0 0.0
    %227 = vmatpush1.msra.mxu0 %v189
    %228 = vmatprep.subr.mxu0 0.0
    %229 = vmatpush1.msra.mxu0 %v190
    %230 = vmatprep.subr.mxu0 0.0
    %231 = vmatpush1.msra.mxu0 0.0
    %232 = vmatprep.subr.mxu0 0.0
    %233 = vmatpush1.msra.mxu0 0.0
    %234 = vmatprep.subr.mxu0 0.0
    %235 = vmatpush1.msra.mxu0 0.0
    %236 = vmatprep.subr.mxu0 0.0
    %237 = vmatpush1.msra.mxu0 0.0
    %238 = vmatprep.subr.mxu0 0.0
    %239 = vmatpush1.msra.mxu0 0.0
    %240 = vmatprep.subr.mxu0 0.0
    %241 = vmatpush1.msra.mxu0 0.0
    %242 = vmatprep.subr.mxu0 0.0
    %243 = vmatpush1.msra.mxu0 0.0
    %244 = vmatprep.subr.mxu0 0.0
    %245 = vmatpush1.msra.mxu0 0.0
    %246 = vmatprep.subr.mxu0 0.0
    %247 = vmatpush1.msra.mxu0 0.0
    %248 = vmatprep.subr.mxu0 0.0
    %249 = vmatpush1.msra.mxu0 0.0
    %250 = vmatprep.subr.mxu0 0.0
    %251 = vmatpush1.msra.mxu0 0.0
    %252 = vmatprep.subr.mxu0 0.0
    %253 = vmatpush1.msra.mxu0 0.0
    %254 = vmatprep.subr.mxu0 0.0
    %255 = vmatpush1.msra.mxu0 0.0
    %256 = vmatprep.subr.mxu0 0.0
    %257 = vmatpush1.msra.mxu0 0.0
    %258 = vmatprep.subr.mxu0 0.0
    %259 = vmatpush1.msra.mxu0 0.0
    %260 = vmatprep.subr.mxu0 0.0
    %261 = vmatpush1.msra.mxu0 0.0
    %262 = vmatprep.mubr.f32.mxu0 0.0
    %263 = vmatmul.mubr.f32.gmra.mrb[0].mxu0 %v174
    %v264 = vpop.f32.mrb[0].mxu0
    %v265 = vadd.f32 %v196, %v264
    %v266 = vpop.f32.mrb[0].mxu0
    %267 = vdwg.mxu0
    %v268 = vmax.f32 %v265, 0.0
    %v269 = vld [vmem:[#allocation8] sm:$0xff]
    %v270 = vld [vmem:[#allocation8 + $0x8] sm:$0xff]
    %v271 = vld [vmem:[#allocation8 + $0x10] sm:$0xff]
    %v272 = vld [vmem:[#allocation8 + $0x18] sm:$0xff]
    %v273 = vld [vmem:[#allocation8 + $0x20] sm:$0xff]
    %v274 = vld [vmem:[#allocation8 + $0x28] sm:$0xff]
    %v275 = vld [vmem:[#allocation8 + $0x30] sm:$0xff]
    %v276 = vld [vmem:[#allocation8 + $0x38] sm:$0xff]
    %v277 = vld [vmem:[#allocation8 + $0x40] sm:$0xff]
    %v278 = vld [vmem:[#allocation8 + $0x48] sm:$0xff]
    %v279 = vld [vmem:[#allocation8 + $0x50] sm:$0xff]
    %v280 = vld [vmem:[#allocation8 + $0x58] sm:$0xff]
    %v281 = vld [vmem:[#allocation8 + $0x60] sm:$0xff]
    %v282 = vld [vmem:[#allocation8 + $0x68] sm:$0xff]
    %v283 = vld [vmem:[#allocation8 + $0x70] sm:$0xff]
    %v284 = vld [vmem:[#allocation8 + $0x78] sm:$0xff]
    %v285 = vld [vmem:[%s6] sm:$0x1]
    %v287 = vlaneseq
    %v288 = vshrl.u32 %v287, 7
    %v289 = vsub.s32 0, %v288
    %v290 = vrot.slane %v285, %v289
    %292 = vmatprep.subr.mxu0 0.0
    %293 = vmatpush1.msra.mxu0 %v269
    %294 = vmatprep.subr.mxu0 0.0
    %295 = vmatpush1.msra.mxu0 %v270
    %296 = vmatprep.subr.mxu0 0.0
    %297 = vmatpush1.msra.mxu0 %v271
    %298 = vmatprep.subr.mxu0 0.0
    %299 = vmatpush1.msra.mxu0 %v272
    %300 = vmatprep.subr.mxu0 0.0
    %301 = vmatpush1.msra.mxu0 %v273
    %302 = vmatprep.subr.mxu0 0.0
    %303 = vmatpush1.msra.mxu0 %v274
    %304 = vmatprep.subr.mxu0 0.0
    %305 = vmatpush1.msra.mxu0 %v275
    %306 = vmatprep.subr.mxu0 0.0
    %307 = vmatpush1.msra.mxu0 %v276
    %308 = vmatprep.subr.mxu0 0.0
    %309 = vmatpush1.msra.mxu0 %v277
    %310 = vmatprep.subr.mxu0 0.0
    %311 = vmatpush1.msra.mxu0 %v278
    %312 = vmatprep.subr.mxu0 0.0
    %313 = vmatpush1.msra.mxu0 %v279
    %314 = vmatprep.subr.mxu0 0.0
    %315 = vmatpush1.msra.mxu0 %v280
    %316 = vmatprep.subr.mxu0 0.0
    %317 = vmatpush1.msra.mxu0 %v281
    %318 = vmatprep.subr.mxu0 0.0
    %319 = vmatpush1.msra.mxu0 %v282
    %320 = vmatprep.subr.mxu0 0.0
    %321 = vmatpush1.msra.mxu0 %v283
    %322 = vmatprep.subr.mxu0 0.0
    %323 = vmatpush1.msra.mxu0 %v284
    %324 = vmatprep.subr.mxu0 0.0
    %325 = vmatpush1.msra.mxu0 0.0
    %326 = vmatprep.subr.mxu0 0.0
    %327 = vmatpush1.msra.mxu0 0.0
    %328 = vmatprep.subr.mxu0 0.0
    %329 = vmatpush1.msra.mxu0 0.0
    %330 = vmatprep.subr.mxu0 0.0
    %331 = vmatpush1.msra.mxu0 0.0
    %332 = vmatprep.subr.mxu0 0.0
    %333 = vmatpush1.msra.mxu0 0.0
    %334 = vmatprep.subr.mxu0 0.0
    %335 = vmatpush1.msra.mxu0 0.0
    %336 = vmatprep.subr.mxu0 0.0
    %337 = vmatpush1.msra.mxu0 0.0
    %338 = vmatprep.subr.mxu0 0.0
    %339 = vmatpush1.msra.mxu0 0.0
    %340 = vmatprep.subr.mxu0 0.0
    %341 = vmatpush1.msra.mxu0 0.0
    %342 = vmatprep.subr.mxu0 0.0
    %343 = vmatpush1.msra.mxu0 0.0
    %344 = vmatprep.subr.mxu0 0.0
    %345 = vmatpush1.msra.mxu0 0.0
    %346 = vmatprep.subr.mxu0 0.0
    %347 = vmatpush1.msra.mxu0 0.0
    %348 = vmatprep.subr.mxu0 0.0
    %349 = vmatpush1.msra.mxu0 0.0
    %350 = vmatprep.subr.mxu0 0.0
    %351 = vmatpush1.msra.mxu0 0.0
    %352 = vmatprep.subr.mxu0 0.0
    %353 = vmatpush1.msra.mxu0 0.0
    %354 = vmatprep.subr.mxu0 0.0
    %355 = vmatpush1.msra.mxu0 0.0
    %356 = vmatprep.mubr.f32.mxu0 0.0
    %357 = vmatmul.mubr.f32.gmra.mrb[0].mxu0 %v268
    %v358 = vpop.f32.mrb[0].mxu0
    %v359 = vadd.f32 %v290, %v358
    %v360 = vpop.f32.mrb[0].mxu0
    %361 = vdwg.mxu0
    %362 = vst [vmem:[#allocation10] sm:$0xff] %v359
    // Predicated region
    $region46: #{tpu_custom_call.1} parent=1 // pred_check
      _
    $region47: #{tpu_custom_call.1} parent=1 // pred_check_branch
      %364 = sbr.rel (0) target = $region49
    $region48: #{tpu_custom_call.1} parent=1 // pred_region
      %s366 = ssub.s32 128, 128
      %367 = vsyncadd [#allocation4], %s366
      %s369 = sshll.u32 [#allocation10], 4
      %s370 = int_to_ptr.vmem [resolvable:$true] %s369
      %372 = dma.vmem_to_hbm [thread:$0]  %s370, 128, %s7, [#allocation4]
    $region49: #{tpu_custom_call.1} parent=1 // pred_fallthru
      _
    // Predicated region
    $region50: #{tpu_custom_call.1} parent=1 // pred_check
      _
    $region51: #{tpu_custom_call.1} parent=1 // pred_check_branch
      %374 = sbr.rel (0) target = $region53
    $region52: #{tpu_custom_call.1} parent=1 // pred_region
      %375 = dma.done [#allocation4], 128
    $region53: #{tpu_custom_call.1} parent=1 // pred_fallthru
      _
    %376 = vsyncpa [#allocation3], 1
    %377 = vsyncpa [#allocation6], 1
    %378 = vsyncpa [#allocation9], 1
    %379 = vsyncpa [#allocation4], 1

// kernel: tpu_custom_call.1
$region0: #{tpu_custom_call.1}
  #allocation0 [shape = 'u32[]', space=smem, size = 0x4, offset = 0x4, fixed_abs, tag = 'smem constant byte address 0x4 - core index']
  #allocation1 [shape = 'u32[144,128]{1,0:T(1,128)}', space=vmem, size = 0x12000, scoped, tag = 'internal scratch']
  %s0 = inlined_call_operand.hbm [shape: f32[8,128], index: 0, kind: input, shape index: {}]
  %s1 = inlined_call_operand.hbm [shape: f32[128,128], index: 1, kind: input, shape index: {}]
  %s2 = inlined_call_operand.vmem [shape: f32[1,128], index: 2, kind: input, shape index: {}]
  %s3 = inlined_call_operand.hbm [shape: f32[128,128], index: 3, kind: input, shape index: {}]
  %s4 = inlined_call_operand.vmem [shape: f32[1,128], index: 4, kind: input, shape index: {}]
  %s5 = inlined_call_operand.hbm [shape: f32[128,128], index: 5, kind: input, shape index: {}]
  %s6 = inlined_call_operand.vmem [shape: f32[1,128], index: 6, kind: input, shape index: {}]
  %s7 = inlined_call_operand.hbm [shape: f32[8,128], index: 7, kind: output, shape index: {}]
  %s8 = sld [smem:[#allocation0]]
  $region54: #{tpu_custom_call.1} parent=0
    _
  %s10 = ssub.s32 1, %s8
  %s11 = scalar_select 0, %s10, %s8
  $region1: #{tpu_custom_call.1} parent=0
    #allocation2 [shape = 'u8[4096]{0}', space=vmem, size = 0x1000, scoped, tag = 'input window, operand 0, single buffered']
    #allocation3 [shape = 's32[1]{0}', space=sflag, size = 0x4, scoped, tag = 'scoped memory for tpu_custom_call.1']
    #allocation4 [shape = 's32[1]{0}', space=sflag, size = 0x4, scoped, tag = 'scoped memory for tpu_custom_call.1']
    #allocation5 [shape = 'u8[65536]{0}', space=vmem, size = 0x10000, scoped, tag = 'input window, operand 1, single buffered']
    #allocation6 [shape = 's32[1]{0}', space=sflag, size = 0x4, scoped, tag = 'scoped memory for tpu_custom_call.1']
    #allocation7 [shape = 'u8[65536]{0}', space=vmem, size = 0x10000, scoped, tag = 'input window, operand 3, single buffered']
    #allocation8 [shape = 'u8[65536]{0}', space=vmem, size = 0x10000, scoped, tag = 'input window, operand 5, single buffered']
    #allocation9 [shape = 's32[1]{0}', space=sflag, size = 0x4, scoped, tag = 'scoped memory for tpu_custom_call.1']
    #allocation10 [shape = 'u8[4096]{0}', space=vmem, size = 0x1000, scoped, tag = 'output window, operand 0, single buffered']
    %12 = vsyncpa [#allocation3], 0
    %13 = vsyncpa [#allocation6], 0
    %14 = vsyncpa [#allocation9], 0
    %15 = vsyncpa [#allocation4], 0
    // Predicated region
    $region2: #{tpu_custom_call.1} parent=1 // pred_check
      _
    $region3: #{tpu_custom_call.1} parent=1 // pred_check_branch
      %17 = sbr.rel (0) target = $region5
    $region4: #{tpu_custom_call.1} parent=1 // pred_region
      %s19 = ssub.s32 128, 128
      %20 = vsyncadd [#allocation3], %s19
      %s22 = sshll.u32 [#allocation2], 4
      %s23 = int_to_ptr.vmem [resolvable:$true] %s22
      %25 = dma.hbm_to_vmem [thread:$0]  %s0, 128, %s23, [#allocation3]
    $region5: #{tpu_custom_call.1} parent=1 // pred_fallthru
      _
    // Predicated region
    $region6: #{tpu_custom_call.1} parent=1 // pred_check
      _
    $region7: #{tpu_custom_call.1} parent=1 // pred_check_branch
      %27 = sbr.rel (0) target = $region9
    $region8: #{tpu_custom_call.1} parent=1 // pred_region
      %s29 = ssub.s32 2048, 2048
      %30 = vsyncadd [#allocation6], %s29
      %s31 = sshll.u32 [#allocation5], 4
      %s32 = int_to_ptr.vmem [resolvable:$true] %s31
      %37 = dma.hbm_to_vmem [thread:$0]  %s1, 2048, %s32, [#allocation6], 128, 128, 8
    $region9: #{tpu_custom_call.1} parent=1 // pred_fallthru
      _
    // Predicated region
    $region10: #{tpu_custom_call.1} parent=1 // pred_check
      _
    $region11: #{tpu_custom_call.1} parent=1 // pred_check_branch
      %39 = sbr.rel (0) target = $region13
    $region12: #{tpu_custom_call.1} parent=1 // pred_region
      _
    $region13: #{tpu_custom_call.1} parent=1 // pred_fallthru
      _
    // Predicated region
    $region14: #{tpu_custom_call.1} parent=1 // pred_check
      _
    $region15: #{tpu_custom_call.1} parent=1 // pred_check_branch
      %41 = sbr.rel (0) target = $region17
    $region16: #{tpu_custom_call.1} parent=1 // pred_region
      %s43 = ssub.s32 2048, 2048
      %44 = vsyncadd [#allocation6], %s43
      %s45 = sshll.u32 [#allocation7], 4
      %s46 = int_to_ptr.vmem [resolvable:$true] %s45
      %51 = dma.hbm_to_vmem [thread:$0]  %s3, 2048, %s46, [#allocation6], 128, 128, 8
    $region17: #{tpu_custom_call.1} parent=1 // pred_fallthru
      _
    // Predicated region
    $region18: #{tpu_custom_call.1} parent=1 // pred_check
      _
    $region19: #{tpu_custom_call.1} parent=1 // pred_check_branch
      %53 = sbr.rel (0) target = $region21
    $region20: #{tpu_custom_call.1} parent=1 // pred_region
      _
    $region21: #{tpu_custom_call.1} parent=1 // pred_fallthru
      _
    // Predicated region
    $region22: #{tpu_custom_call.1} parent=1 // pred_check
      _
    $region23: #{tpu_custom_call.1} parent=1 // pred_check_branch
      %55 = sbr.rel (0) target = $region25
    $region24: #{tpu_custom_call.1} parent=1 // pred_region
      %s57 = ssub.s32 2048, 2048
      %58 = vsyncadd [#allocation9], %s57
      %s59 = sshll.u32 [#allocation8], 4
      %s60 = int_to_ptr.vmem [resolvable:$true] %s59
      %65 = dma.hbm_to_vmem [thread:$0]  %s5, 2048, %s60, [#allocation9], 128, 128, 8
    $region25: #{tpu_custom_call.1} parent=1 // pred_fallthru
      _
    // Predicated region
    $region26: #{tpu_custom_call.1} parent=1 // pred_check
      _
    $region27: #{tpu_custom_call.1} parent=1 // pred_check_branch
      %67 = sbr.rel (0) target = $region29
    $region28: #{tpu_custom_call.1} parent=1 // pred_region
      _
    $region29: #{tpu_custom_call.1} parent=1 // pred_fallthru
      _
    // Predicated region
    $region30: #{tpu_custom_call.1} parent=1 // pred_check
      _
    $region31: #{tpu_custom_call.1} parent=1 // pred_check_branch
      %69 = sbr.rel (0) target = $region33
    $region32: #{tpu_custom_call.1} parent=1 // pred_region
      %70 = dma.done [#allocation3], 128
    $region33: #{tpu_custom_call.1} parent=1 // pred_fallthru
      _
    // Predicated region
    $region34: #{tpu_custom_call.1} parent=1 // pred_check
      _
    $region35: #{tpu_custom_call.1} parent=1 // pred_check_branch
      %72 = sbr.rel (0) target = $region37
    $region36: #{tpu_custom_call.1} parent=1 // pred_region
      %73 = dma.done [#allocation6], 2048
    $region37: #{tpu_custom_call.1} parent=1 // pred_fallthru
      _
    // Predicated region
    $region38: #{tpu_custom_call.1} parent=1 // pred_check
      _
    $region39: #{tpu_custom_call.1} parent=1 // pred_check_branch
      %75 = sbr.rel (0) target = $region41
    $region40: #{tpu_custom_call.1} parent=1 // pred_region
      %76 = dma.done [#allocation6], 2048
    $region41: #{tpu_custom_call.1} parent=1 // pred_fallthru
      _
    // Predicated region
    $region42: #{tpu_custom_call.1} parent=1 // pred_check
      _
    $region43: #{tpu_custom_call.1} parent=1 // pred_check_branch
      %78 = sbr.rel (0) target = $region45
    $region44: #{tpu_custom_call.1} parent=1 // pred_region
      %79 = dma.done [#allocation9], 2048
    $region45: #{tpu_custom_call.1} parent=1 // pred_fallthru
      _
    %v80 = vld [vmem:[#allocation2] sm:$0xff]
    %v81 = vld [vmem:[#allocation5] sm:$0xff]
    %v82 = vld [vmem:[#allocation5 + $0x8] sm:$0xff]
    %v83 = vld [vmem:[#allocation5 + $0x10] sm:$0xff]
    %v84 = vld [vmem:[#allocation5 + $0x18] sm:$0xff]
    %v85 = vld [vmem:[#allocation5 + $0x20] sm:$0xff]
    %v86 = vld [vmem:[#allocation5 + $0x28] sm:$0xff]
    %v87 = vld [vmem:[#allocation5 + $0x30] sm:$0xff]
    %v88 = vld [vmem:[#allocation5 + $0x38] sm:$0xff]
    %v89 = vld [vmem:[#allocation5 + $0x40] sm:$0xff]
    %v90 = vld [vmem:[#allocation5 + $0x48] sm:$0xff]
    %v91 = vld [vmem:[#allocation5 + $0x50] sm:$0xff]
    %v92 = vld [vmem:[#allocation5 + $0x58] sm:$0xff]
    %v93 = vld [vmem:[#allocation5 + $0x60] sm:$0xff]
    %v94 = vld [vmem:[#allocation5 + $0x68] sm:$0xff]
    %v95 = vld [vmem:[#allocation5 + $0x70] sm:$0xff]
    %v96 = vld [vmem:[#allocation5 + $0x78] sm:$0xff]
    %v97 = vld [vmem:[%s2] sm:$0x1]
    %v99 = vlaneseq
    %v100 = vshrl.u32 %v99, 7
    %v101 = vsub.s32 0, %v100
    %v102 = vrot.slane %v97, %v101
    %104 = vmatprep.subr.mxu0 0.0
    %105 = vmatpush1.msra.mxu0 %v81
    %106 = vmatprep.subr.mxu0 0.0
    %107 = vmatpush1.msra.mxu0 %v82
    %108 = vmatprep.subr.mxu0 0.0
    %109 = vmatpush1.msra.mxu0 %v83
    %110 = vmatprep.subr.mxu0 0.0
    %111 = vmatpush1.msra.mxu0 %v84
    %112 = vmatprep.subr.mxu0 0.0
    %113 = vmatpush1.msra.mxu0 %v85
    %114 = vmatprep.subr.mxu0 0.0
    %115 = vmatpush1.msra.mxu0 %v86
    %116 = vmatprep.subr.mxu0 0.0
    %117 = vmatpush1.msra.mxu0 %v87
    %118 = vmatprep.subr.mxu0 0.0
    %119 = vmatpush1.msra.mxu0 %v88
    %120 = vmatprep.subr.mxu0 0.0
    %121 = vmatpush1.msra.mxu0 %v89
    %122 = vmatprep.subr.mxu0 0.0
    %123 = vmatpush1.msra.mxu0 %v90
    %124 = vmatprep.subr.mxu0 0.0
    %125 = vmatpush1.msra.mxu0 %v91
    %126 = vmatprep.subr.mxu0 0.0
    %127 = vmatpush1.msra.mxu0 %v92
    %128 = vmatprep.subr.mxu0 0.0
    %129 = vmatpush1.msra.mxu0 %v93
    %130 = vmatprep.subr.mxu0 0.0
    %131 = vmatpush1.msra.mxu0 %v94
    %132 = vmatprep.subr.mxu0 0.0
    %133 = vmatpush1.msra.mxu0 %v95
    %134 = vmatprep.subr.mxu0 0.0
    %135 = vmatpush1.msra.mxu0 %v96
    %136 = vmatprep.subr.mxu0 0.0
    %137 = vmatpush1.msra.mxu0 0.0
    %138 = vmatprep.subr.mxu0 0.0
    %139 = vmatpush1.msra.mxu0 0.0
    %140 = vmatprep.subr.mxu0 0.0
    %141 = vmatpush1.msra.mxu0 0.0
    %142 = vmatprep.subr.mxu0 0.0
    %143 = vmatpush1.msra.mxu0 0.0
    %144 = vmatprep.subr.mxu0 0.0
    %145 = vmatpush1.msra.mxu0 0.0
    %146 = vmatprep.subr.mxu0 0.0
    %147 = vmatpush1.msra.mxu0 0.0
    %148 = vmatprep.subr.mxu0 0.0
    %149 = vmatpush1.msra.mxu0 0.0
    %150 = vmatprep.subr.mxu0 0.0
    %151 = vmatpush1.msra.mxu0 0.0
    %152 = vmatprep.subr.mxu0 0.0
    %153 = vmatpush1.msra.mxu0 0.0
    %154 = vmatprep.subr.mxu0 0.0
    %155 = vmatpush1.msra.mxu0 0.0
    %156 = vmatprep.subr.mxu0 0.0
    %157 = vmatpush1.msra.mxu0 0.0
    %158 = vmatprep.subr.mxu0 0.0
    %159 = vmatpush1.msra.mxu0 0.0
    %160 = vmatprep.subr.mxu0 0.0
    %161 = vmatpush1.msra.mxu0 0.0
    %162 = vmatprep.subr.mxu0 0.0
    %163 = vmatpush1.msra.mxu0 0.0
    %164 = vmatprep.subr.mxu0 0.0
    %165 = vmatpush1.msra.mxu0 0.0
    %166 = vmatprep.subr.mxu0 0.0
    %167 = vmatpush1.msra.mxu0 0.0
    %168 = vmatprep.mubr.f32.mxu0 0.0
    %169 = vmatmul.mubr.f32.gmra.mrb[0].mxu0 %v80
    %v170 = vpop.f32.mrb[0].mxu0
    %v171 = vadd.f32 %v102, %v170
    %v172 = vpop.f32.mrb[0].mxu0
    %173 = vdwg.mxu0
    %v174 = vmax.f32 %v171, 0.0
    %v175 = vld [vmem:[#allocation7] sm:$0xff]
    %v176 = vld [vmem:[#allocation7 + $0x8] sm:$0xff]
    %v177 = vld [vmem:[#allocation7 + $0x10] sm:$0xff]
    %v178 = vld [vmem:[#allocation7 + $0x18] sm:$0xff]
    %v179 = vld [vmem:[#allocation7 + $0x20] sm:$0xff]
    %v180 = vld [vmem:[#allocation7 + $0x28] sm:$0xff]
    %v181 = vld [vmem:[#allocation7 + $0x30] sm:$0xff]
    %v182 = vld [vmem:[#allocation7 + $0x38] sm:$0xff]
    %v183 = vld [vmem:[#allocation7 + $0x40] sm:$0xff]
    %v184 = vld [vmem:[#allocation7 + $0x48] sm:$0xff]
    %v185 = vld [vmem:[#allocation7 + $0x50] sm:$0xff]
    %v186 = vld [vmem:[#allocation7 + $0x58] sm:$0xff]
    %v187 = vld [vmem:[#allocation7 + $0x60] sm:$0xff]
    %v188 = vld [vmem:[#allocation7 + $0x68] sm:$0xff]
    %v189 = vld [vmem:[#allocation7 + $0x70] sm:$0xff]
    %v190 = vld [vmem:[#allocation7 + $0x78] sm:$0xff]
    %v191 = vld [vmem:[%s4] sm:$0x1]
    %v193 = vlaneseq
    %v194 = vshrl.u32 %v193, 7
    %v195 = vsub.s32 0, %v194
    %v196 = vrot.slane %v191, %v195
    %198 = vmatprep.subr.mxu0 0.0
    %199 = vmatpush1.msra.mxu0 %v175
    %200 = vmatprep.subr.mxu0 0.0
    %201 = vmatpush1.msra.mxu0 %v176
    %202 = vmatprep.subr.mxu0 0.0
    %203 = vmatpush1.msra.mxu0 %v177
    %204 = vmatprep.subr.mxu0 0.0
    %205 = vmatpush1.msra.mxu0 %v178
    %206 = vmatprep.subr.mxu0 0.0
    %207 = vmatpush1.msra.mxu0 %v179
    %208 = vmatprep.subr.mxu0 0.0
    %209 = vmatpush1.msra.mxu0 %v180
    %210 = vmatprep.subr.mxu0 0.0
    %211 = vmatpush1.msra.mxu0 %v181
    %212 = vmatprep.subr.mxu0 0.0
    %213 = vmatpush1.msra.mxu0 %v182
    %214 = vmatprep.subr.mxu0 0.0
    %215 = vmatpush1.msra.mxu0 %v183
    %216 = vmatprep.subr.mxu0 0.0
    %217 = vmatpush1.msra.mxu0 %v184
    %218 = vmatprep.subr.mxu0 0.0
    %219 = vmatpush1.msra.mxu0 %v185
    %220 = vmatprep.subr.mxu0 0.0
    %221 = vmatpush1.msra.mxu0 %v186
    %222 = vmatprep.subr.mxu0 0.0
    %223 = vmatpush1.msra.mxu0 %v187
    %224 = vmatprep.subr.mxu0 0.0
    %225 = vmatpush1.msra.mxu0 %v188
    %226 = vmatprep.subr.mxu0 0.0
    %227 = vmatpush1.msra.mxu0 %v189
    %228 = vmatprep.subr.mxu0 0.0
    %229 = vmatpush1.msra.mxu0 %v190
    %230 = vmatprep.subr.mxu0 0.0
    %231 = vmatpush1.msra.mxu0 0.0
    %232 = vmatprep.subr.mxu0 0.0
    %233 = vmatpush1.msra.mxu0 0.0
    %234 = vmatprep.subr.mxu0 0.0
    %235 = vmatpush1.msra.mxu0 0.0
    %236 = vmatprep.subr.mxu0 0.0
    %237 = vmatpush1.msra.mxu0 0.0
    %238 = vmatprep.subr.mxu0 0.0
    %239 = vmatpush1.msra.mxu0 0.0
    %240 = vmatprep.subr.mxu0 0.0
    %241 = vmatpush1.msra.mxu0 0.0
    %242 = vmatprep.subr.mxu0 0.0
    %243 = vmatpush1.msra.mxu0 0.0
    %244 = vmatprep.subr.mxu0 0.0
    %245 = vmatpush1.msra.mxu0 0.0
    %246 = vmatprep.subr.mxu0 0.0
    %247 = vmatpush1.msra.mxu0 0.0
    %248 = vmatprep.subr.mxu0 0.0
    %249 = vmatpush1.msra.mxu0 0.0
    %250 = vmatprep.subr.mxu0 0.0
    %251 = vmatpush1.msra.mxu0 0.0
    %252 = vmatprep.subr.mxu0 0.0
    %253 = vmatpush1.msra.mxu0 0.0
    %254 = vmatprep.subr.mxu0 0.0
    %255 = vmatpush1.msra.mxu0 0.0
    %256 = vmatprep.subr.mxu0 0.0
    %257 = vmatpush1.msra.mxu0 0.0
    %258 = vmatprep.subr.mxu0 0.0
    %259 = vmatpush1.msra.mxu0 0.0
    %260 = vmatprep.subr.mxu0 0.0
    %261 = vmatpush1.msra.mxu0 0.0
    %262 = vmatprep.mubr.f32.mxu0 0.0
    %263 = vmatmul.mubr.f32.gmra.mrb[0].mxu0 %v174
    %v264 = vpop.f32.mrb[0].mxu0
    %v265 = vadd.f32 %v196, %v264
    %v266 = vpop.f32.mrb[0].mxu0
    %267 = vdwg.mxu0
    %v268 = vmax.f32 %v265, 0.0
    %v269 = vld [vmem:[#allocation8] sm:$0xff]
    %v270 = vld [vmem:[#allocation8 + $0x8] sm:$0xff]
    %v271 = vld [vmem:[#allocation8 + $0x10] sm:$0xff]
    %v272 = vld [vmem:[#allocation8 + $0x18] sm:$0xff]
    %v273 = vld [vmem:[#allocation8 + $0x20] sm:$0xff]
    %v274 = vld [vmem:[#allocation8 + $0x28] sm:$0xff]
    %v275 = vld [vmem:[#allocation8 + $0x30] sm:$0xff]
    %v276 = vld [vmem:[#allocation8 + $0x38] sm:$0xff]
    %v277 = vld [vmem:[#allocation8 + $0x40] sm:$0xff]
    %v278 = vld [vmem:[#allocation8 + $0x48] sm:$0xff]
    %v279 = vld [vmem:[#allocation8 + $0x50] sm:$0xff]
    %v280 = vld [vmem:[#allocation8 + $0x58] sm:$0xff]
    %v281 = vld [vmem:[#allocation8 + $0x60] sm:$0xff]
    %v282 = vld [vmem:[#allocation8 + $0x68] sm:$0xff]
    %v283 = vld [vmem:[#allocation8 + $0x70] sm:$0xff]
    %v284 = vld [vmem:[#allocation8 + $0x78] sm:$0xff]
    %v285 = vld [vmem:[%s6] sm:$0x1]
    %v287 = vlaneseq
    %v288 = vshrl.u32 %v287, 7
    %v289 = vsub.s32 0, %v288
    %v290 = vrot.slane %v285, %v289
    %292 = vmatprep.subr.mxu0 0.0
    %293 = vmatpush1.msra.mxu0 %v269
    %294 = vmatprep.subr.mxu0 0.0
    %295 = vmatpush1.msra.mxu0 %v270
    %296 = vmatprep.subr.mxu0 0.0
    %297 = vmatpush1.msra.mxu0 %v271
    %298 = vmatprep.subr.mxu0 0.0
    %299 = vmatpush1.msra.mxu0 %v272
    %300 = vmatprep.subr.mxu0 0.0
    %301 = vmatpush1.msra.mxu0 %v273
    %302 = vmatprep.subr.mxu0 0.0
    %303 = vmatpush1.msra.mxu0 %v274
    %304 = vmatprep.subr.mxu0 0.0
    %305 = vmatpush1.msra.mxu0 %v275
    %306 = vmatprep.subr.mxu0 0.0
    %307 = vmatpush1.msra.mxu0 %v276
    %308 = vmatprep.subr.mxu0 0.0
    %309 = vmatpush1.msra.mxu0 %v277
    %310 = vmatprep.subr.mxu0 0.0
    %311 = vmatpush1.msra.mxu0 %v278
    %312 = vmatprep.subr.mxu0 0.0
    %313 = vmatpush1.msra.mxu0 %v279
    %314 = vmatprep.subr.mxu0 0.0
    %315 = vmatpush1.msra.mxu0 %v280
    %316 = vmatprep.subr.mxu0 0.0
    %317 = vmatpush1.msra.mxu0 %v281
    %318 = vmatprep.subr.mxu0 0.0
    %319 = vmatpush1.msra.mxu0 %v282
    %320 = vmatprep.subr.mxu0 0.0
    %321 = vmatpush1.msra.mxu0 %v283
    %322 = vmatprep.subr.mxu0 0.0
    %323 = vmatpush1.msra.mxu0 %v284
    %324 = vmatprep.subr.mxu0 0.0
    %325 = vmatpush1.msra.mxu0 0.0
    %326 = vmatprep.subr.mxu0 0.0
    %327 = vmatpush1.msra.mxu0 0.0
    %328 = vmatprep.subr.mxu0 0.0
    %329 = vmatpush1.msra.mxu0 0.0
    %330 = vmatprep.subr.mxu0 0.0
    %331 = vmatpush1.msra.mxu0 0.0
    %332 = vmatprep.subr.mxu0 0.0
    %333 = vmatpush1.msra.mxu0 0.0
    %334 = vmatprep.subr.mxu0 0.0
    %335 = vmatpush1.msra.mxu0 0.0
    %336 = vmatprep.subr.mxu0 0.0
    %337 = vmatpush1.msra.mxu0 0.0
    %338 = vmatprep.subr.mxu0 0.0
    %339 = vmatpush1.msra.mxu0 0.0
    %340 = vmatprep.subr.mxu0 0.0
    %341 = vmatpush1.msra.mxu0 0.0
    %342 = vmatprep.subr.mxu0 0.0
    %343 = vmatpush1.msra.mxu0 0.0
    %344 = vmatprep.subr.mxu0 0.0
    %345 = vmatpush1.msra.mxu0 0.0
    %346 = vmatprep.subr.mxu0 0.0
    %347 = vmatpush1.msra.mxu0 0.0
    %348 = vmatprep.subr.mxu0 0.0
    %349 = vmatpush1.msra.mxu0 0.0
    %350 = vmatprep.subr.mxu0 0.0
    %351 = vmatpush1.msra.mxu0 0.0
    %352 = vmatprep.subr.mxu0 0.0
    %353 = vmatpush1.msra.mxu0 0.0
    %354 = vmatprep.subr.mxu0 0.0
    %355 = vmatpush1.msra.mxu0 0.0
    %356 = vmatprep.mubr.f32.mxu0 0.0
    %357 = vmatmul.mubr.f32.gmra.mrb[0].mxu0 %v268
    %v358 = vpop.f32.mrb[0].mxu0
    %v359 = vadd.f32 %v290, %v358
    %v360 = vpop.f32.mrb[0].mxu0
    %361 = vdwg.mxu0
    %362 = vst [vmem:[#allocation10] sm:$0xff] %v359
    // Predicated region
    $region46: #{tpu_custom_call.1} parent=1 // pred_check
      _
    $region47: #{tpu_custom_call.1} parent=1 // pred_check_branch
      %364 = sbr.rel (0) target = $region49
    $region48: #{tpu_custom_call.1} parent=1 // pred_region
      %s366 = ssub.s32 128, 128
      %367 = vsyncadd [#allocation4], %s366
      %s369 = sshll.u32 [#allocation10], 4
      %s370 = int_to_ptr.vmem [resolvable:$true] %s369
      %372 = dma.vmem_to_hbm [thread:$0]  %s370, 128, %s7, [#allocation4]
    $region49: #{tpu_custom_call.1} parent=1 // pred_fallthru
      _
    // Predicated region
    $region50: #{tpu_custom_call.1} parent=1 // pred_check
      _
    $region51: #{tpu_custom_call.1} parent=1 // pred_check_branch
      %374 = sbr.rel (0) target = $region53
    $region52: #{tpu_custom_call.1} parent=1 // pred_region
      %375 = dma.done [#allocation4], 128
    $region53: #{tpu_custom_call.1} parent=1 // pred_fallthru
      _
    %376 = vsyncpa [#allocation3], 1
    %377 = vsyncpa [#allocation6], 1
    %378 = vsyncpa [#allocation9], 1
    %379 = vsyncpa [#allocation4], 1

</llo_original>
